<compile_context>
chip_gen: v5e
topology: v5e:2x2
jax: 0.10.0
libtpu: 0.0.40
codegen_flags: <defaults>
</compile_context>

<pallas_src>
import jax
import jax.numpy as jnp
from jax import lax
from jax.experimental import pallas as pl
from jax.experimental.pallas import tpu as pltpu


_LANE_BLK = 32 * 1024   # max lanes per grid step for the 2-D layout
_ROW_BLK = 256          # max (128-lane) rows per grid step for the 3-D layout


def _conv_kernel_2d(w_ref, x_ref, o_ref):
    """Grouped 1x1 conv on a lane-dense block.

    w_ref : SMEM (4,)      -- [w00, w01, w10, w11]
    x_ref : VMEM (4, BLK)  -- input block, channel-major
    o_ref : VMEM (2, BLK)  -- output block, channel-major
    """
    x = x_ref[...]
    # two direct per-channel row writes (no sublane concat/shuffle)
    o_ref[0:1, :] = x[0:1, :] * w_ref[0] + x[1:2, :] * w_ref[1]
    o_ref[1:2, :] = x[2:3, :] * w_ref[2] + x[3:4, :] * w_ref[3]


def _conv_kernel_3d(w_ref, x_ref, o_ref):
    """Grouped 1x1 conv on a sublane-dense (C, rows, 128) block.

    w_ref : SMEM (4,)
    x_ref : VMEM (4, R_BLK, 128)
    o_ref : VMEM (2, R_BLK, 128)
    """
    x = x_ref[...]
    o_ref[0:1, :, :] = x[0:1] * w_ref[0] + x[1:2] * w_ref[1]
    o_ref[1:2, :, :] = x[2:3] * w_ref[2] + x[3:4] * w_ref[3]


def model_forward(x1, x2, x3, weight, bias):
    """x1: (1, 4, H, W) float32; x2, x3: scalars.

    Returns (1, 2, H+2, W+2) float32 (Conv2d padding=1 with a 1x1 kernel).
    """
    n, cin, h, w = x1.shape
    assert n == 1 and cin == 4

    p = h * w
    x_flat = x1.reshape(cin, p).astype(jnp.float32)

    # 4 weight scalars for SMEM; fused (bias + 2*x3 + x2 + 1) applied in wrapper.
    wvec = weight.reshape(2, 2).astype(jnp.float32).reshape(4)
    add_const = (2.0 * jnp.asarray(x3, jnp.float32)
                 + jnp.asarray(x2, jnp.float32) + 1.0)
    c = bias.astype(jnp.float32) + add_const                      # (2,)

    cparams = pltpu.CompilerParams(dimension_semantics=("parallel",))
    smem_spec = pl.BlockSpec(memory_space=pltpu.MemorySpace.SMEM)

    r = p // 128
    if p % 128 == 0 and r % 8 == 0:
        # sublane-dense 3-D layout: every (8,128) tile fully used, unmasked stores
        rblk = min(r, _ROW_BLK)
        conv = pl.pallas_call(
            _conv_kernel_3d,
            out_shape=jax.ShapeDtypeStruct((2, r, 128), jnp.float32),
            grid=(pl.cdiv(r, rblk),),
            in_specs=[
                smem_spec,
                pl.BlockSpec((cin, rblk, 128), lambda i: (0, i, 0)),
            ],
            out_specs=pl.BlockSpec((2, rblk, 128), lambda i: (0, i, 0)),
            compiler_params=cparams,
        )(wvec, x_flat.reshape(cin, r, 128))
    else:
        # lane-dense 2-D layout; big blocks, cdiv grid, ragged last block OK
        blk = p if p <= _LANE_BLK else _LANE_BLK
        conv = pl.pallas_call(
            _conv_kernel_2d,
            out_shape=jax.ShapeDtypeStruct((2, p), jnp.float32),
            grid=(pl.cdiv(p, blk),),
            in_specs=[
                smem_spec,
                pl.BlockSpec((cin, blk), lambda i: (0, i)),
            ],
            out_specs=pl.BlockSpec((2, blk), lambda i: (0, i)),
            compiler_params=cparams,
        )(wvec, x_flat)

    conv = conv.reshape(2, h, w)

    # Border of the padded 1x1 conv is data-independent: exactly bias + adds.
    # Single fused pad + broadcast-add (no broadcast_to + scatter second pass).
    out = lax.pad(conv, jnp.float32(0.0), ((0, 0, 0), (1, 1, 0), (1, 1, 0)))
    out = out + c[:, None, None]
    return out[None]


def _reference(x1, x2, x3, weight, bias):
    """Pure-JAX reference of the same (valid, groups=2) conv config."""
    xp = jnp.pad(x1, ((0, 0), (0, 0), (1, 1), (1, 1)))
    w2 = weight.reshape(2, 2)
    ref0 = xp[0, 0] * w2[0, 0] + xp[0, 1] * w2[0, 1] + bias[0]
    ref1 = xp[0, 2] * w2[1, 0] + xp[0, 3] * w2[1, 1] + bias[1]
    return jnp.stack([ref0, ref1])[None] + (x3 + 1) + x2 + x3


if __name__ == "__main__":
    key = jax.random.PRNGKey(0)
    k_a, k_b, k_w, k_bias = jax.random.split(key, 4)

    x2 = 1
    x3 = 1
    # Conv2d weight shape (2, 2, 1, 1) (groups=2), bias (2,)
    weight = jax.random.normal(k_w, (2, 2, 1, 1), dtype=jnp.float32) * 0.5
    bias = jax.random.normal(k_bias, (2,), dtype=jnp.float32) * 0.1

    fwd = jax.jit(model_forward)

    # small shape (exercises the lane-dense 2-D path)
    x1_small = jax.random.normal(k_a, (1, 4, 16, 16), dtype=jnp.float32)
    out_small = jax.block_until_ready(fwd(x1_small, x2, x3, weight, bias))
    ref_small = _reference(x1_small, x2, x3, weight, bias)
    assert out_small.shape == (1, 2, 18, 18)
    assert jnp.allclose(out_small, ref_small, atol=1e-5), "mismatch (16x16)"

    # the spec's shape (exercises the sublane-dense 3-D path)
    x1_spec = jax.random.normal(k_b, (1, 4, 64, 64), dtype=jnp.float32)
    out_spec = jax.block_until_ready(fwd(x1_spec, x2, x3, weight, bias))
    ref_spec = _reference(x1_spec, x2, x3, weight, bias)
    assert out_spec.shape == (1, 2, 66, 66)
    assert jnp.allclose(out_spec, ref_spec, atol=1e-5), "mismatch (64x64)"

    print("KERNEL_OK")
</pallas_src>

<mosaic_0001>
module attributes {stable_mosaic.version = 11 : i64} {
  func.func @_conv_kernel_2d(%arg0: i32, %arg1: memref<4xf32, #tpu.memory_space<smem>>, %arg2: memref<4x256xf32, #tpu.memory_space<vmem>>, %arg3: memref<2x256xf32, #tpu.memory_space<vmem>>) attributes {dimension_semantics = [#tpu.dimension_semantics<parallel>], iteration_bounds = array<i64: 1>, scalar_prefetch = 0 : i64, scratch_operands = 0 : i64, tpu.core_type = #tpu.core_type<tc>, window_params = [{transform_indices = @transform_0, window_bounds = array<i64: 4>}, {transform_indices = @transform_1, window_bounds = array<i64: 4, 256>}, {transform_indices = @transform_2, window_bounds = array<i64: 2, 256>}]} {
    %c0 = arith.constant 0 : index
    %c0_0 = arith.constant 0 : index
    %0 = vector.load %arg2[%c0, %c0_0] : memref<4x256xf32, #tpu.memory_space<vmem>>, vector<4x256xf32>
    %1 = vector.extract_strided_slice %0 {offsets = [0, 0], sizes = [1, 256], strides = [1, 1]} : vector<4x256xf32> to vector<1x256xf32>
    %c0_1 = arith.constant 0 : index
    %2 = memref.load %arg1[%c0_1] : memref<4xf32, #tpu.memory_space<smem>>
    %3 = vector.broadcast %2 : f32 to vector<1x256xf32>
    %4 = arith.mulf %1, %3 : vector<1x256xf32>
    %5 = vector.extract_strided_slice %0 {offsets = [1, 0], sizes = [1, 256], strides = [1, 1]} : vector<4x256xf32> to vector<1x256xf32>
    %c1 = arith.constant 1 : index
    %6 = memref.load %arg1[%c1] : memref<4xf32, #tpu.memory_space<smem>>
    %7 = vector.broadcast %6 : f32 to vector<1x256xf32>
    %8 = arith.mulf %5, %7 : vector<1x256xf32>
    %9 = arith.addf %4, %8 : vector<1x256xf32>
    %c0_2 = arith.constant 0 : index
    %c0_3 = arith.constant 0 : index
    %10 = vector.load %arg3[%c0_2, %c0_3] : memref<2x256xf32, #tpu.memory_space<vmem>>, vector<1x256xf32>
    tpu.vector_store %arg3[%c0_2, %c0_3], %9 {strides = array<i32>} : memref<2x256xf32, #tpu.memory_space<vmem>>, vector<1x256xf32>,
    %11 = vector.extract_strided_slice %0 {offsets = [2, 0], sizes = [1, 256], strides = [1, 1]} : vector<4x256xf32> to vector<1x256xf32>
    %c2 = arith.constant 2 : index
    %12 = memref.load %arg1[%c2] : memref<4xf32, #tpu.memory_space<smem>>
    %13 = vector.broadcast %12 : f32 to vector<1x256xf32>
    %14 = arith.mulf %11, %13 : vector<1x256xf32>
    %15 = vector.extract_strided_slice %0 {offsets = [3, 0], sizes = [1, 256], strides = [1, 1]} : vector<4x256xf32> to vector<1x256xf32>
    %c3 = arith.constant 3 : index
    %16 = memref.load %arg1[%c3] : memref<4xf32, #tpu.memory_space<smem>>
    %17 = vector.broadcast %16 : f32 to vector<1x256xf32>
    %18 = arith.mulf %15, %17 : vector<1x256xf32>
    %19 = arith.addf %14, %18 : vector<1x256xf32>
    %c1_4 = arith.constant 1 : index
    %c0_5 = arith.constant 0 : index
    %20 = vector.load %arg3[%c1_4, %c0_5] : memref<2x256xf32, #tpu.memory_space<vmem>>, vector<1x256xf32>
    tpu.vector_store %arg3[%c1_4, %c0_5], %19 {strides = array<i32>} : memref<2x256xf32, #tpu.memory_space<vmem>>, vector<1x256xf32>,
    return
  }
  func.func @transform_0(%arg0: i32) -> i32 {
    %c0_i32 = arith.constant 0 : i32
    %c0_i32_0 = arith.constant 0 : i32
    return %c0_i32 : i32
  }
  func.func @transform_1(%arg0: i32) -> (i32, i32) {
    %c0_i32 = arith.constant 0 : i32
    %c0_i32_0 = arith.constant 0 : i32
    return %c0_i32, %arg0 : i32, i32
  }
  func.func @transform_2(%arg0: i32) -> (i32, i32) {
    %c0_i32 = arith.constant 0 : i32
    %c0_i32_0 = arith.constant 0 : i32
    return %c0_i32, %arg0 : i32, i32
  }
}

</mosaic_0001>

<llo_original>
// kernel: model_forward.1
$region0: #{model_forward.1}
  #allocation0 [shape = 'u32[]', space=smem, size = 0x4, offset = 0x4, fixed_abs, tag = 'smem constant byte address 0x4 - core index']
  #allocation1 [shape = 'u32[72,128]{1,0:T(1,128)}', space=vmem, size = 0x9000, scoped, tag = 'internal scratch']
  %s0 = inlined_call_operand.vmem [shape: f32[4], index: 0, kind: input, shape index: {}]
  %s1 = inlined_call_operand.vmem [shape: f32[4,256], index: 1, kind: input, shape index: {}]
  %s2 = inlined_call_operand.vmem [shape: f32[2,256], index: 2, kind: output, shape index: {}]
  %s3 = sld [smem:[#allocation0]]
  $region22: #{model_forward.1} parent=0
    _
  %s5 = ssub.s32 1, %s3
  %s6 = scalar_select 0, %s5, %s3
  $region1: #{model_forward.1} parent=0
    #allocation2 [shape = 'u8[512]{0}', space=smem, size = 0x200, scoped, tag = 'input window, operand 0, single buffered']
    #allocation3 [shape = 's32[1]{0}', space=sflag, size = 0x4, scoped, tag = 'scoped memory for model_forward.1']
    %7 = vsyncpa [#allocation3], 0
    // Predicated region
    $region2: #{model_forward.1} parent=1 // pred_check
      _
    $region3: #{model_forward.1} parent=1 // pred_check_branch
      %9 = sbr.rel (0) target = $region5
    $region4: #{model_forward.1} parent=1 // pred_region
      %11 = vsyncadd [#allocation3], 0
      %s13 = sshll.u32 %s0, 4
      %s14 = int_to_ptr.vmem [resolvable:$true] %s13
      %16 = dma.vmem_to_smem %s14, 16, [#allocation2], [#allocation3]
    $region5: #{model_forward.1} parent=1 // pred_fallthru
      _
    // Predicated region
    $region6: #{model_forward.1} parent=1 // pred_check
      _
    $region7: #{model_forward.1} parent=1 // pred_check_branch
      %18 = sbr.rel (0) target = $region9
    $region8: #{model_forward.1} parent=1 // pred_region
      _
    $region9: #{model_forward.1} parent=1 // pred_fallthru
      _
    // Predicated region
    $region10: #{model_forward.1} parent=1 // pred_check
      _
    $region11: #{model_forward.1} parent=1 // pred_check_branch
      %20 = sbr.rel (0) target = $region13
    $region12: #{model_forward.1} parent=1 // pred_region
      %22 = dma.done [#allocation3], 16
    $region13: #{model_forward.1} parent=1 // pred_fallthru
      _
    %23 = sfence
    %v24 = vld [vmem:[%s1] sm:$0xff]
    %s25 = sld [smem:[#allocation2]]
    %v26 = vstv %s25
    %v27 = vmul.f32 %v24, %v26
    %s28 = sld [smem:[#allocation2 + $0x1]]
    %v29 = vstv %s28
    %v30 = vmul.f32 %v24, %v29
    %v32 = vrot.slane %v30, 5
    %v33 = vrot.slane %v32, 4
    %v35 = vadd.f32 %v27, %v33
    %v37 = vrot.slane %v35, 3
    %vm38 = vcmask 1040384
    %v39 = vsel %vm38, %v35, %v37
    %v41 = vlaneseq
    %vm42 = vcmp.ge.s32.totalorder %v41, 0
    %vm43 = vcmp.lt.s32.totalorder %v41, 256
    %vm44 = vmand %vm42, %vm43
    %45 = vst.msk [vmem:[%s2] ss:$2 sm:$0x3] %vm44, %v39
    %s46 = sld [smem:[#allocation2 + $0x2]]
    %v47 = vstv %s46
    %v48 = vmul.f32 %v24, %v47
    %s49 = sld [smem:[#allocation2 + $0x3]]
    %v50 = vstv %s49
    %v51 = vmul.f32 %v24, %v50
    %v53 = vrot.slane %v51, 5
    %v54 = vrot.slane %v53, 4
    %v56 = vadd.f32 %v48, %v54
    %58 = vst [vmem:[#allocation1] sm:$0xff] %v56
    %s59 = scalar_lea.vmem [#allocation1], 2
    %v60 = vld [vmem:[%s59] ss:$4 sm:$0xff]
    %s62 = scalar_lea.vmem %s2, 1
    %63 = vst.msk [vmem:[%s62] ss:$2 sm:$0x3] %vm44, %v60
    // Predicated region
    $region14: #{model_forward.1} parent=1 // pred_check
      _
    $region15: #{model_forward.1} parent=1 // pred_check_branch
      %65 = sbr.rel (0) target = $region17
    $region16: #{model_forward.1} parent=1 // pred_region
      _
    $region17: #{model_forward.1} parent=1 // pred_fallthru
      _
    // Predicated region
    $region18: #{model_forward.1} parent=1 // pred_check
      _
    $region19: #{model_forward.1} parent=1 // pred_check_branch
      %67 = sbr.rel (0) target = $region21
    $region20: #{model_forward.1} parent=1 // pred_region
      _
    $region21: #{model_forward.1} parent=1 // pred_fallthru
      _
    %68 = vsyncpa [#allocation3], 1

</llo_original>
